<compile_context>
chip_gen: v5e
topology: v5e:2x2
jax: 0.10.0
libtpu: 0.0.40
codegen_flags: <defaults>
</compile_context>

<pallas_src>
import functools

import jax
import jax.numpy as jnp
from jax.experimental import pallas as pl
from jax.experimental.pallas import tpu as pltpu


# ------------------------------- helpers ----------------------------------- #

def _round_up(x, m):
    return (x + m - 1) // m * m


def _pick_rows_per_strip(rows_out, pitch, hidden_ch, budget_bytes=8 << 20):
    """Output rows per grid strip.  Prefer the full image (one strip per batch
    element); only split when the f32 hidden working set would be large, and
    then only into divisors whose flat length is 128-lane aligned."""
    def hidden_bytes(ors):
        return 4 * hidden_ch * ((ors + 2) * pitch + 2)

    if hidden_bytes(rows_out) <= budget_bytes:
        return rows_out
    for ors in range(rows_out - 1, 0, -1):
        if (rows_out % ors == 0 and (ors * pitch) % 128 == 0
                and hidden_bytes(ors) <= budget_bytes):
            return ors
    return rows_out          # fallback: full image (correct, just bigger)


# --------------------------- fused Pallas kernels --------------------------- #

def _make_s1_kernel(Wp, Lout, Lh, S, has_expand, residual):
    """Fused expand + dw3x3(stride 1) + project over one (batch, row-strip).

    Channel-major layout: every tensor is (channels, flat_padded_spatial) with
    flat = row * Wp + col, so depthwise taps are static lane shifts.  The two
    columns per row with col in {W, W+1} are garbage, sliced off in the
    wrapper."""

    def kernel(*refs):
        if has_expand:
            (xp_ref, m_ref, w1_ref, b1_ref, wdw_ref, b2_ref, w2_ref, b3_ref,
             o_ref) = refs
        else:
            xp_ref, m_ref, wdw_ref, b2_ref, w2_ref, b3_ref, o_ref = refs

        if S > 1:
            base = pl.multiple_of(pl.program_id(1) * Lout, 128)
        else:
            base = 0

        xs = xp_ref[0, :, pl.ds(base, Lh)].astype(jnp.float32)   # (Cin, Lh)
        m = m_ref[:, pl.ds(base, Lh)]                            # (1, Lh)

        # ---- expand 1x1 (+ folded BN) + ReLU6, zeroed in the halo ----
        if has_expand:
            h = jnp.dot(w1_ref[...], xs, preferred_element_type=jnp.float32)
            h = jnp.clip(h + b1_ref[...], 0.0, 6.0)              # (Chid, Lh)
        else:
            h = xs
        h = h * m

        # ---- depthwise 3x3 stride 1 (+ folded BN) + ReLU6 ----
        wdw = wdw_ref[...]                                       # (Chid, 9)
        acc = h[:, 0:Lout] * wdw[:, 0:1]
        for kh in range(3):
            for kw in range(3):
                t = 3 * kh + kw
                if t == 0:
                    continue
                sh = kh * Wp + kw
                acc = acc + h[:, sh:sh + Lout] * wdw[:, t:t + 1]
        acc = jnp.clip(acc + b2_ref[...], 0.0, 6.0)              # (Chid, Lout)

        # ---- project 1x1 (+ folded BN) (+ residual) ----
        y = jnp.dot(w2_ref[...], acc, preferred_element_type=jnp.float32)
        y = y + b3_ref[...]
        if residual:
            y = y + xp_ref[0, :, pl.ds(base + Wp + 1, Lout)].astype(jnp.float32)
        o_ref[0] = y.astype(o_ref.dtype)

    return kernel


def _make_s2_kernel(Wh, Lout2, Lh2, S2, has_expand, Chid):
    """Fused block for stride=2 on (row,col)-parity planes.

    Plane p = (kh%2)*2 + (kw%2) holds x_pad[2i+kh%2, 2j+kw%2]; tap (kh,kw)
    of the stride-2 depthwise conv is then a pure lane shift
    (kh//2)*Wh + (kw//2) within that plane.  Expand runs once per pixel."""

    def kernel(*refs):
        if has_expand:
            (xq_ref, mq_ref, w1_ref, b1_ref, wdw_ref, b2_ref, w2_ref, b3_ref,
             o_ref) = refs
        else:
            xq_ref, mq_ref, wdw_ref, b2_ref, w2_ref, b3_ref, o_ref = refs

        if S2 > 1:
            base = pl.multiple_of(pl.program_id(1) * Lout2, 128)
        else:
            base = 0

        wdw = wdw_ref[...]                                       # (Chid, 9)
        acc = jnp.zeros((Chid, Lout2), jnp.float32)
        for pr in range(2):
            for pc in range(2):
                p = pr * 2 + pc
                xs = xq_ref[0, p, :, pl.ds(base, Lh2)].astype(jnp.float32)
                m = mq_ref[p, :, pl.ds(base, Lh2)]               # (1, Lh2)
                if has_expand:
                    hq = jnp.dot(w1_ref[...], xs,
                                 preferred_element_type=jnp.float32)
                    hq = jnp.clip(hq + b1_ref[...], 0.0, 6.0)
                else:
                    hq = xs
                hq = hq * m                                      # zero halo
                for kh in range(pr, 3, 2):
                    for kw in range(pc, 3, 2):
                        t = 3 * kh + kw
                        sh = (kh // 2) * Wh + (kw // 2)
                        acc = acc + hq[:, sh:sh + Lout2] * wdw[:, t:t + 1]
        acc = jnp.clip(acc + b2_ref[...], 0.0, 6.0)

        y = jnp.dot(w2_ref[...], acc, preferred_element_type=jnp.float32)
        y = y + b3_ref[...]
        o_ref[0] = y.astype(o_ref.dtype)

    return kernel


# --------------------------------- wrapper ---------------------------------- #

@functools.partial(jax.jit, static_argnames=("stride", "expand_ratio"))
def inverted_residual(x_nchw, w1, s1, b1, w_dw, s2, b2, w2, s3, b3,
                      *, stride, expand_ratio):
    N, Cin, H, W = x_nchw.shape
    Chid = w_dw.shape[-1]
    Cout = w2.shape[1]
    has_expand = expand_ratio != 1
    if not has_expand and Chid != Cin:
        raise ValueError("expand_ratio==1 requires depthwise width == Cin")
    residual = (stride == 1) and (Cin == Cout)
    f32 = jnp.float32
    dt = x_nchw.dtype

    Hp, Wp = H + 2, W + 2

    # Fold BN scales into the conv weights; transpose to channel-major so the
    # in-kernel matmuls are (out_ch, in_ch) x (in_ch, L).
    if has_expand:
        w1f = jnp.transpose(w1.astype(f32) * s1.astype(f32)[None, :])   # (Chid, Cin)
        b1f = b1.astype(f32).reshape(Chid, 1)
    wdwf = jnp.transpose((w_dw.astype(f32) * s2.astype(f32)).reshape(9, Chid))  # (Chid, 9)
    b2f = b2.astype(f32).reshape(Chid, 1)
    w2f = jnp.transpose(w2.astype(f32) * s3.astype(f32)[None, :])       # (Cout, Chid)
    b3f = b3.astype(f32).reshape(Cout, 1)

    # Input stays NCHW in its original dtype; only a small spatial zero pad.
    xp = jnp.pad(x_nchw, ((0, 0), (0, 0), (1, 1), (1, 1)))              # (N,Cin,Hp,Wp)

    def weight_specs_args():
        specs, args = [], []
        if has_expand:
            specs += [pl.BlockSpec((Chid, Cin), lambda n, s: (0, 0)),
                      pl.BlockSpec((Chid, 1), lambda n, s: (0, 0))]
            args += [w1f, b1f]
        specs += [pl.BlockSpec((Chid, 9), lambda n, s: (0, 0)),
                  pl.BlockSpec((Chid, 1), lambda n, s: (0, 0)),
                  pl.BlockSpec((Cout, Chid), lambda n, s: (0, 0)),
                  pl.BlockSpec((Cout, 1), lambda n, s: (0, 0))]
        args += [wdwf, b2f, w2f, b3f]
        return specs, args

    compiler_params = pltpu.CompilerParams(
        dimension_semantics=("parallel", "parallel"),
        vmem_limit_bytes=32 * 1024 * 1024)     # v7x-safe (64 MiB physical)

    if stride == 1:
        Ho = H
        ORS = _pick_rows_per_strip(Ho, Wp, Chid)
        S = Ho // ORS
        Lout = ORS * Wp
        assert S == 1 or Lout % 128 == 0, (S, Lout)
        Lh = Lout + 2 * Wp + 2
        P = Hp * Wp
        Pf = _round_up(max(P, (S - 1) * Lout + Lh), 128)
        # Guard against silent OOB reads (no VMEM bounds check on TPU).
        assert (S - 1) * Lout + Lh <= Pf and P <= Pf

        xpf = jnp.pad(xp.reshape(N, Cin, P), ((0, 0), (0, 0), (0, Pf - P)))
        rr = jnp.arange(Hp)
        cc = jnp.arange(Wp)
        m2 = ((rr[:, None] >= 1) & (rr[:, None] <= H)
              & (cc[None, :] >= 1) & (cc[None, :] <= W)).astype(f32)
        maskf = jnp.pad(m2.reshape(1, P), ((0, 0), (0, Pf - P)))         # (1, Pf)

        kernel = _make_s1_kernel(Wp, Lout, Lh, S, has_expand, residual)
        w_specs, w_args = weight_specs_args()
        in_specs = [pl.BlockSpec((1, Cin, Pf), lambda n, s: (n, 0, 0)),
                    pl.BlockSpec((1, Pf), lambda n, s: (0, 0))] + w_specs

        outf = pl.pallas_call(
            kernel,
            out_shape=jax.ShapeDtypeStruct((N, Cout, Ho * Wp), dt),
            grid=(N, S),
            in_specs=in_specs,
            out_specs=pl.BlockSpec((1, Cout, Lout), lambda n, s: (n, 0, s)),
            compiler_params=compiler_params,
        )(xpf, maskf, *w_args)
        # Already NCHW; drop the 2 padded-width garbage columns per row.
        out = outf.reshape(N, Cout, Ho, Wp)[:, :, :, :W]

    else:  # stride == 2
        Ho = (H - 1) // 2 + 1
        Wo = (W - 1) // 2 + 1
        Hp2 = Hp + (Hp % 2)
        Wp2 = Wp + (Wp % 2)
        Hh, Wh = Hp2 // 2, Wp2 // 2
        Lq = Hh * Wh
        ORS2 = _pick_rows_per_strip(Ho, Wh, Chid)
        S2 = Ho // ORS2
        Lout2 = ORS2 * Wh
        assert S2 == 1 or Lout2 % 128 == 0, (S2, Lout2)
        Lh2 = (ORS2 + 1) * Wh + 1
        Lqf = _round_up(max(Lq, (S2 - 1) * Lout2 + Lh2), 128)
        assert (S2 - 1) * Lout2 + Lh2 <= Lqf and Lq <= Lqf

        # One 1x-sized reorder of the SMALL padded input into 4 parity planes
        # (replaces the old 9x tap replication in HBM).
        xp2 = jnp.pad(xp, ((0, 0), (0, 0), (0, Hp2 - Hp), (0, Wp2 - Wp)))
        xq = xp2.reshape(N, Cin, Hh, 2, Wh, 2).transpose(0, 3, 5, 1, 2, 4)
        xq = xq.reshape(N, 4, Cin, Lq)
        xq = jnp.pad(xq, ((0, 0), (0, 0), (0, 0), (0, Lqf - Lq)))

        hh = jnp.arange(Hh)
        wh = jnp.arange(Wh)
        planes = []
        for pr in range(2):
            for pc in range(2):
                rv = (2 * hh + pr >= 1) & (2 * hh + pr <= H)
                cv = (2 * wh + pc >= 1) & (2 * wh + pc <= W)
                planes.append((rv[:, None] & cv[None, :]).astype(f32).reshape(1, Lq))
        mq = jnp.stack(planes, axis=0)                                   # (4,1,Lq)
        mq = jnp.pad(mq, ((0, 0), (0, 0), (0, Lqf - Lq)))

        kernel = _make_s2_kernel(Wh, Lout2, Lh2, S2, has_expand, Chid)
        w_specs, w_args = weight_specs_args()
        in_specs = [pl.BlockSpec((1, 4, Cin, Lqf), lambda n, s: (n, 0, 0, 0)),
                    pl.BlockSpec((4, 1, Lqf), lambda n, s: (0, 0, 0))] + w_specs

        outf = pl.pallas_call(
            kernel,
            out_shape=jax.ShapeDtypeStruct((N, Cout, Ho * Wh), dt),
            grid=(N, S2),
            in_specs=in_specs,
            out_specs=pl.BlockSpec((1, Cout, Lout2), lambda n, s: (n, 0, s)),
            compiler_params=compiler_params,
        )(xq, mq, *w_args)
        # Already NCHW; drop the single garbage plane column per row.
        out = outf.reshape(N, Cout, Ho, Wh)[:, :, :, :Wo]

    return out


# ------------------------ pure-JAX reference (check) ------------------------ #

def _reference(x_nchw, w1, s1, b1, w_dw, s2, b2, w2, s3, b3, stride, expand_ratio):
    N, Cin, H, W = x_nchw.shape
    residual = (stride == 1) and (Cin == w2.shape[1])
    x = jnp.transpose(x_nchw, (0, 2, 3, 1)).astype(jnp.float32)
    if expand_ratio != 1:
        h = jnp.clip(jnp.einsum("nhwc,cd->nhwd", x, w1) * s1 + b1, 0.0, 6.0)
    else:
        h = x
    hp = jnp.pad(h, ((0, 0), (1, 1), (1, 1), (0, 0)))
    Ho = (H - 1) // stride + 1
    Wo = (W - 1) // stride + 1
    acc = jnp.zeros((N, Ho, Wo, h.shape[-1]), jnp.float32)
    for kh in range(3):
        for kw in range(3):
            acc = acc + hp[:, kh:kh + (Ho - 1) * stride + 1:stride,
                           kw:kw + (Wo - 1) * stride + 1:stride, :] * w_dw[kh, kw]
    d = jnp.clip(acc * s2 + b2, 0.0, 6.0)
    y = jnp.einsum("nhwc,cd->nhwd", d, w2) * s3 + b3
    if residual:
        y = y + x
    return jnp.transpose(y, (0, 3, 1, 2))


# ---------------------------------- main ------------------------------------ #

if __name__ == "__main__":
    key = jax.random.PRNGKey(0)
    kx, kA, kB = jax.random.split(key, 3)

    def bn_params(k, c):
        k1, k2, k3, k4 = jax.random.split(k, 4)
        gamma = jax.random.uniform(k1, (c,), jnp.float32, 0.5, 1.5)
        beta = 0.1 * jax.random.normal(k2, (c,), jnp.float32)
        mean = 0.1 * jax.random.normal(k3, (c,), jnp.float32)
        var = jax.random.uniform(k4, (c,), jnp.float32, 0.5, 1.5)
        eps = 1e-5
        scale = gamma / jnp.sqrt(var + eps)
        bias = beta - mean * scale
        return scale, bias

    def make_weights(k, cin, chid, cout):
        ks = jax.random.split(k, 6)
        w1 = 0.1 * jax.random.normal(ks[0], (cin, chid), jnp.float32)
        w_dw = 0.1 * jax.random.normal(ks[1], (3, 3, chid), jnp.float32)
        w2 = 0.1 * jax.random.normal(ks[2], (chid, cout), jnp.float32)
        s1, b1 = bn_params(ks[3], chid)
        s2, b2 = bn_params(ks[4], chid)
        s3, b3 = bn_params(ks[5], cout)
        return w1, s1, b1, w_dw, s2, b2, w2, s3, b3

    N, H, W = 2, 16, 16
    x = jax.random.normal(kx, (N, 8, H, W), jnp.float32)

    # Config A: InvertedResidual(inp=8, outp=8, stride=1, expand_ratio=24)
    # (residual connection; hidden width = expand_ratio per the literal spec).
    paramsA = make_weights(kA, 8, 24, 8)
    outA = jax.block_until_ready(
        inverted_residual(x, *paramsA, stride=1, expand_ratio=24))
    refA = _reference(x, *paramsA, stride=1, expand_ratio=24)
    assert outA.shape == (N, 8, H, W), outA.shape
    errA = float(jnp.max(jnp.abs(outA - refA)))
    assert errA < 1e-3, errA

    # Config B: InvertedResidual(inp=8, outp=16, stride=2, expand_ratio=24)
    paramsB = make_weights(kB, 8, 24, 16)
    outB = jax.block_until_ready(
        inverted_residual(x, *paramsB, stride=2, expand_ratio=24))
    refB = _reference(x, *paramsB, stride=2, expand_ratio=24)
    assert outB.shape == (N, 16, H // 2, W // 2), outB.shape
    errB = float(jnp.max(jnp.abs(outB - refB)))
    assert errB < 1e-3, errB

    print("KERNEL_OK")
</pallas_src>

<mosaic_0001>
module attributes {stable_mosaic.version = 11 : i64} {
  func.func @kernel(%arg0: i32, %arg1: i32, %arg2: memref<1x8x384xf32, #tpu.memory_space<vmem>>, %arg3: memref<1x384xf32, #tpu.memory_space<vmem>>, %arg4: memref<24x8xf32, #tpu.memory_space<vmem>>, %arg5: memref<24x1xf32, #tpu.memory_space<vmem>>, %arg6: memref<24x9xf32, #tpu.memory_space<vmem>>, %arg7: memref<24x1xf32, #tpu.memory_space<vmem>>, %arg8: memref<8x24xf32, #tpu.memory_space<vmem>>, %arg9: memref<8x1xf32, #tpu.memory_space<vmem>>, %arg10: memref<1x8x288xf32, #tpu.memory_space<vmem>>) attributes {dimension_semantics = [#tpu.dimension_semantics<parallel>, #tpu.dimension_semantics<parallel>], iteration_bounds = array<i64: 2, 1>, scalar_prefetch = 0 : i64, scratch_operands = 0 : i64, tpu.core_type = #tpu.core_type<tc>, window_params = [{transform_indices = @transform_0, window_bounds = array<i64: 1, 8, 384>}, {pipeline_mode = #tpu.pipeline_mode<synchronous>, transform_indices = @transform_1, window_bounds = array<i64: 1, 384>}, {pipeline_mode = #tpu.pipeline_mode<synchronous>, transform_indices = @transform_2, window_bounds = array<i64: 24, 8>}, {pipeline_mode = #tpu.pipeline_mode<synchronous>, transform_indices = @transform_3, window_bounds = array<i64: 24, 1>}, {pipeline_mode = #tpu.pipeline_mode<synchronous>, transform_indices = @transform_4, window_bounds = array<i64: 24, 9>}, {pipeline_mode = #tpu.pipeline_mode<synchronous>, transform_indices = @transform_5, window_bounds = array<i64: 24, 1>}, {pipeline_mode = #tpu.pipeline_mode<synchronous>, transform_indices = @transform_6, window_bounds = array<i64: 8, 24>}, {pipeline_mode = #tpu.pipeline_mode<synchronous>, transform_indices = @transform_7, window_bounds = array<i64: 8, 1>}, {transform_indices = @transform_8, window_bounds = array<i64: 1, 8, 288>}]} {
    %c0 = arith.constant 0 : index
    %c0_0 = arith.constant 0 : index
    %c0_1 = arith.constant 0 : index
    %0 = vector.load %arg2[%c0, %c0_0, %c0_1] : memref<1x8x384xf32, #tpu.memory_space<vmem>>, vector<1x8x326xf32>
    %1 = vector.shape_cast %0 : vector<1x8x326xf32> to vector<8x326xf32>
    %c0_2 = arith.constant 0 : index
    %c0_3 = arith.constant 0 : index
    %2 = vector.load %arg3[%c0_2, %c0_3] : memref<1x384xf32, #tpu.memory_space<vmem>>, vector<1x326xf32>
    %c0_4 = arith.constant 0 : index
    %c0_5 = arith.constant 0 : index
    %3 = vector.load %arg4[%c0_4, %c0_5] : memref<24x8xf32, #tpu.memory_space<vmem>>, vector<24x8xf32>
    %cst = arith.constant dense<0.000000e+00> : vector<24x326xf32>
    %4 = tpu.matmul %3, %1, %cst {dimension_numbers = #tpu.dot_dimension_numbers<[1], [0], [0], [1], [0, 0, 1, 1], [], []>} : vector<24x8xf32>, vector<8x326xf32>, vector<24x326xf32> -> vector<24x326xf32>
    %c0_6 = arith.constant 0 : index
    %c0_7 = arith.constant 0 : index
    %5 = vector.load %arg5[%c0_6, %c0_7] : memref<24x1xf32, #tpu.memory_space<vmem>>, vector<24x1xf32>
    %6 = vector.broadcast %5 : vector<24x1xf32> to vector<24x326xf32>
    %7 = arith.addf %4, %6 : vector<24x326xf32>
    %cst_8 = arith.constant 0.000000e+00 : f32
    %cst_9 = arith.constant 6.000000e+00 : f32
    %8 = vector.broadcast %cst_8 : f32 to vector<24x326xf32>
    %9 = arith.maximumf %8, %7 : vector<24x326xf32>
    %10 = vector.broadcast %cst_9 : f32 to vector<24x326xf32>
    %11 = arith.minimumf %10, %9 : vector<24x326xf32>
    %12 = vector.broadcast %2 : vector<1x326xf32> to vector<24x326xf32>
    %13 = arith.mulf %11, %12 : vector<24x326xf32>
    %c0_10 = arith.constant 0 : index
    %c0_11 = arith.constant 0 : index
    %14 = vector.load %arg6[%c0_10, %c0_11] : memref<24x9xf32, #tpu.memory_space<vmem>>, vector<24x9xf32>
    %15 = vector.extract_strided_slice %13 {offsets = [0, 0], sizes = [24, 288], strides = [1, 1]} : vector<24x326xf32> to vector<24x288xf32>
    %16 = vector.extract_strided_slice %14 {offsets = [0, 0], sizes = [24, 1], strides = [1, 1]} : vector<24x9xf32> to vector<24x1xf32>
    %17 = vector.broadcast %16 : vector<24x1xf32> to vector<24x288xf32>
    %18 = arith.mulf %15, %17 : vector<24x288xf32>
    %19 = vector.extract_strided_slice %13 {offsets = [0, 1], sizes = [24, 288], strides = [1, 1]} : vector<24x326xf32> to vector<24x288xf32>
    %20 = vector.extract_strided_slice %14 {offsets = [0, 1], sizes = [24, 1], strides = [1, 1]} : vector<24x9xf32> to vector<24x1xf32>
    %21 = vector.broadcast %20 : vector<24x1xf32> to vector<24x288xf32>
    %22 = arith.mulf %19, %21 : vector<24x288xf32>
    %23 = arith.addf %18, %22 : vector<24x288xf32>
    %24 = vector.extract_strided_slice %13 {offsets = [0, 2], sizes = [24, 288], strides = [1, 1]} : vector<24x326xf32> to vector<24x288xf32>
    %25 = vector.extract_strided_slice %14 {offsets = [0, 2], sizes = [24, 1], strides = [1, 1]} : vector<24x9xf32> to vector<24x1xf32>
    %26 = vector.broadcast %25 : vector<24x1xf32> to vector<24x288xf32>
    %27 = arith.mulf %24, %26 : vector<24x288xf32>
    %28 = arith.addf %23, %27 : vector<24x288xf32>
    %29 = vector.extract_strided_slice %13 {offsets = [0, 18], sizes = [24, 288], strides = [1, 1]} : vector<24x326xf32> to vector<24x288xf32>
    %30 = vector.extract_strided_slice %14 {offsets = [0, 3], sizes = [24, 1], strides = [1, 1]} : vector<24x9xf32> to vector<24x1xf32>
    %31 = vector.broadcast %30 : vector<24x1xf32> to vector<24x288xf32>
    %32 = arith.mulf %29, %31 : vector<24x288xf32>
    %33 = arith.addf %28, %32 : vector<24x288xf32>
    %34 = vector.extract_strided_slice %13 {offsets = [0, 19], sizes = [24, 288], strides = [1, 1]} : vector<24x326xf32> to vector<24x288xf32>
    %35 = vector.extract_strided_slice %14 {offsets = [0, 4], sizes = [24, 1], strides = [1, 1]} : vector<24x9xf32> to vector<24x1xf32>
    %36 = vector.broadcast %35 : vector<24x1xf32> to vector<24x288xf32>
    %37 = arith.mulf %34, %36 : vector<24x288xf32>
    %38 = arith.addf %33, %37 : vector<24x288xf32>
    %39 = vector.extract_strided_slice %13 {offsets = [0, 20], sizes = [24, 288], strides = [1, 1]} : vector<24x326xf32> to vector<24x288xf32>
    %40 = vector.extract_strided_slice %14 {offsets = [0, 5], sizes = [24, 1], strides = [1, 1]} : vector<24x9xf32> to vector<24x1xf32>
    %41 = vector.broadcast %40 : vector<24x1xf32> to vector<24x288xf32>
    %42 = arith.mulf %39, %41 : vector<24x288xf32>
    %43 = arith.addf %38, %42 : vector<24x288xf32>
    %44 = vector.extract_strided_slice %13 {offsets = [0, 36], sizes = [24, 288], strides = [1, 1]} : vector<24x326xf32> to vector<24x288xf32>
    %45 = vector.extract_strided_slice %14 {offsets = [0, 6], sizes = [24, 1], strides = [1, 1]} : vector<24x9xf32> to vector<24x1xf32>
    %46 = vector.broadcast %45 : vector<24x1xf32> to vector<24x288xf32>
    %47 = arith.mulf %44, %46 : vector<24x288xf32>
    %48 = arith.addf %43, %47 : vector<24x288xf32>
    %49 = vector.extract_strided_slice %13 {offsets = [0, 37], sizes = [24, 288], strides = [1, 1]} : vector<24x326xf32> to vector<24x288xf32>
    %50 = vector.extract_strided_slice %14 {offsets = [0, 7], sizes = [24, 1], strides = [1, 1]} : vector<24x9xf32> to vector<24x1xf32>
    %51 = vector.broadcast %50 : vector<24x1xf32> to vector<24x288xf32>
    %52 = arith.mulf %49, %51 : vector<24x288xf32>
    %53 = arith.addf %48, %52 : vector<24x288xf32>
    %54 = vector.extract_strided_slice %13 {offsets = [0, 38], sizes = [24, 288], strides = [1, 1]} : vector<24x326xf32> to vector<24x288xf32>
    %55 = vector.extract_strided_slice %14 {offsets = [0, 8], sizes = [24, 1], strides = [1, 1]} : vector<24x9xf32> to vector<24x1xf32>
    %56 = vector.broadcast %55 : vector<24x1xf32> to vector<24x288xf32>
    %57 = arith.mulf %54, %56 : vector<24x288xf32>
    %58 = arith.addf %53, %57 : vector<24x288xf32>
    %c0_12 = arith.constant 0 : index
    %c0_13 = arith.constant 0 : index
    %59 = vector.load %arg7[%c0_12, %c0_13] : memref<24x1xf32, #tpu.memory_space<vmem>>, vector<24x1xf32>
    %60 = vector.broadcast %59 : vector<24x1xf32> to vector<24x288xf32>
    %61 = arith.addf %58, %60 : vector<24x288xf32>
    %cst_14 = arith.constant 0.000000e+00 : f32
    %cst_15 = arith.constant 6.000000e+00 : f32
    %62 = vector.broadcast %cst_14 : f32 to vector<24x288xf32>
    %63 = arith.maximumf %62, %61 : vector<24x288xf32>
    %64 = vector.broadcast %cst_15 : f32 to vector<24x288xf32>
    %65 = arith.minimumf %64, %63 : vector<24x288xf32>
    %c0_16 = arith.constant 0 : index
    %c0_17 = arith.constant 0 : index
    %66 = vector.load %arg8[%c0_16, %c0_17] : memref<8x24xf32, #tpu.memory_space<vmem>>, vector<8x24xf32>
    %cst_18 = arith.constant dense<0.000000e+00> : vector<8x288xf32>
    %67 = tpu.matmul %66, %65, %cst_18 {dimension_numbers = #tpu.dot_dimension_numbers<[1], [0], [0], [1], [0, 0, 1, 1], [], []>} : vector<8x24xf32>, vector<24x288xf32>, vector<8x288xf32> -> vector<8x288xf32>
    %c0_19 = arith.constant 0 : index
    %c0_20 = arith.constant 0 : index
    %68 = vector.load %arg9[%c0_19, %c0_20] : memref<8x1xf32, #tpu.memory_space<vmem>>, vector<8x1xf32>
    %69 = vector.broadcast %68 : vector<8x1xf32> to vector<8x288xf32>
    %70 = arith.addf %67, %69 : vector<8x288xf32>
    %c0_21 = arith.constant 0 : index
    %c0_22 = arith.constant 0 : index
    %c19 = arith.constant 19 : index
    %71 = vector.load %arg2[%c0_21, %c0_22, %c19] : memref<1x8x384xf32, #tpu.memory_space<vmem>>, vector<1x8x288xf32>
    %72 = vector.shape_cast %71 : vector<1x8x288xf32> to vector<8x288xf32>
    %73 = arith.addf %70, %72 : vector<8x288xf32>
    %c0_23 = arith.constant 0 : index
    %c0_24 = arith.constant 0 : index
    %c0_25 = arith.constant 0 : index
    %74 = vector.load %arg10[%c0_23, %c0_24, %c0_25] : memref<1x8x288xf32, #tpu.memory_space<vmem>>, vector<1x8x288xf32>
    %75 = vector.shape_cast %74 : vector<1x8x288xf32> to vector<8x288xf32>
    %76 = vector.shape_cast %73 : vector<8x288xf32> to vector<1x8x288xf32>
    tpu.vector_store %arg10[%c0_23, %c0_24, %c0_25], %76 {strides = array<i32>} : memref<1x8x288xf32, #tpu.memory_space<vmem>>, vector<1x8x288xf32>,
    return
  }
  func.func @transform_0(%arg0: i32, %arg1: i32) -> (i32, i32, i32) {
    %c0_i32 = arith.constant 0 : i32
    %c0_i32_0 = arith.constant 0 : i32
    %c0_i32_1 = arith.constant 0 : i32
    return %arg0, %c0_i32, %c0_i32_0 : i32, i32, i32
  }
  func.func @transform_1(%arg0: i32, %arg1: i32) -> (i32, i32) {
    %c0_i32 = arith.constant 0 : i32
    %c0_i32_0 = arith.constant 0 : i32
    %c0_i32_1 = arith.constant 0 : i32
    return %c0_i32, %c0_i32_0 : i32, i32
  }
  func.func @transform_2(%arg0: i32, %arg1: i32) -> (i32, i32) {
    %c0_i32 = arith.constant 0 : i32
    %c0_i32_0 = arith.constant 0 : i32
    %c0_i32_1 = arith.constant 0 : i32
    return %c0_i32, %c0_i32_0 : i32, i32
  }
  func.func @transform_3(%arg0: i32, %arg1: i32) -> (i32, i32) {
    %c0_i32 = arith.constant 0 : i32
    %c0_i32_0 = arith.constant 0 : i32
    %c0_i32_1 = arith.constant 0 : i32
    return %c0_i32, %c0_i32_0 : i32, i32
  }
  func.func @transform_4(%arg0: i32, %arg1: i32) -> (i32, i32) {
    %c0_i32 = arith.constant 0 : i32
    %c0_i32_0 = arith.constant 0 : i32
    %c0_i32_1 = arith.constant 0 : i32
    return %c0_i32, %c0_i32_0 : i32, i32
  }
  func.func @transform_5(%arg0: i32, %arg1: i32) -> (i32, i32) {
    %c0_i32 = arith.constant 0 : i32
    %c0_i32_0 = arith.constant 0 : i32
    %c0_i32_1 = arith.constant 0 : i32
    return %c0_i32, %c0_i32_0 : i32, i32
  }
  func.func @transform_6(%arg0: i32, %arg1: i32) -> (i32, i32) {
    %c0_i32 = arith.constant 0 : i32
    %c0_i32_0 = arith.constant 0 : i32
    %c0_i32_1 = arith.constant 0 : i32
    return %c0_i32, %c0_i32_0 : i32, i32
  }
  func.func @transform_7(%arg0: i32, %arg1: i32) -> (i32, i32) {
    %c0_i32 = arith.constant 0 : i32
    %c0_i32_0 = arith.constant 0 : i32
    %c0_i32_1 = arith.constant 0 : i32
    return %c0_i32, %c0_i32_0 : i32, i32
  }
  func.func @transform_8(%arg0: i32, %arg1: i32) -> (i32, i32, i32) {
    %c0_i32 = arith.constant 0 : i32
    %c0_i32_0 = arith.constant 0 : i32
    return %arg0, %c0_i32, %arg1 : i32, i32, i32
  }
}

</mosaic_0001>

<llo_original>
// kernel: inverted_residual.1
$region0: #{inverted_residual.1}
  #allocation0 [shape = 'u32[]', space=smem, size = 0x4, offset = 0x4, fixed_abs, tag = 'smem constant byte address 0x4 - core index']
  #allocation1 [shape = 'u32[72,128]{1,0:T(1,128)}', space=vmem, size = 0x9000, scoped, tag = 'internal scratch']
  %s0 = inlined_call_operand.vmem [shape: f32[2,8,384], index: 0, kind: input, shape index: {}]
  %s1 = inlined_call_operand.vmem [shape: f32[1,384], index: 1, kind: input, shape index: {}]
  %s2 = inlined_call_operand.vmem [shape: f32[24,8], index: 2, kind: input, shape index: {}]
  %s3 = inlined_call_operand.vmem [shape: f32[24,1], index: 3, kind: input, shape index: {}]
  %s4 = inlined_call_operand.vmem [shape: f32[24,9], index: 4, kind: input, shape index: {}]
  %s5 = inlined_call_operand.vmem [shape: f32[24,1], index: 5, kind: input, shape index: {}]
  %s6 = inlined_call_operand.vmem [shape: f32[8,24], index: 6, kind: input, shape index: {}]
  %s7 = inlined_call_operand.vmem [shape: f32[8,1], index: 7, kind: input, shape index: {}]
  %s8 = inlined_call_operand.vmem [shape: f32[2,8,288], index: 8, kind: output, shape index: {}]
  %s9 = sld [smem:[#allocation0]]
  $region65: #{inverted_residual.1} parent=0
    _
  %s11 = ssub.s32 1, %s9
  %s12 = scalar_select 0, %s11, %s9
  loop: start=0, step=1, limit=4
  $region2: #{inverted_residual.1} parent=0 // loop_pre_header
    _
  $region3: #{inverted_residual.1} parent=0 // loop_header
    %s14 = sphi 0, %s18
    %p15 = scmp.ge.s32.totalorder %s14, 4
    %s21 = sphi 0, %s33
    %s22 = sphi 0, %s29
    %s23 = sphi 0, %s21
    %s24 = sphi 0, %s22
    %s25 = sphi 0, %s23
    %s26 = sphi 0, %s24
    %s36 = sphi 0, %s38
    %s39 = sphi 0, %s36
    %s40 = sphi 0, %s39
    %s56 = sphi 0, %s40
    %s60 = sphi 0, %s60
    %s62 = sphi 0, %s60
    %s63 = sphi 0, %s62
    %s77 = sphi 0, %s63
    %s81 = sphi 0, %s81
    %s83 = sphi 0, %s81
    %s84 = sphi 0, %s83
    %s98 = sphi 0, %s84
    %s102 = sphi 0, %s102
    %s104 = sphi 0, %s102
    %s105 = sphi 0, %s104
    %s119 = sphi 0, %s105
    %s123 = sphi 0, %s123
    %s125 = sphi 0, %s123
    %s126 = sphi 0, %s125
    %s140 = sphi 0, %s126
    %s144 = sphi 0, %s144
    %s146 = sphi 0, %s144
    %s147 = sphi 0, %s146
    %s161 = sphi 0, %s147
    %s165 = sphi 0, %s165
    %s167 = sphi 0, %s165
    %s168 = sphi 0, %s167
    %s182 = sphi 0, %s168
    %s186 = sphi 0, %s186
    %s188 = sphi 0, %s186
    %s189 = sphi 0, %s188
    %s203 = sphi 0, %s189
    %s211 = sphi 0, %s213
    %s214 = sphi 0, %s211
    %s215 = sphi 0, %s214
    %s231 = sphi 0, %s215
  $region4: #{inverted_residual.1} parent=0 // loop_header_branch
    %17 = sbr.rel (%p15) target = $region8
  $region5: #{inverted_residual.1} parent=0 // loop_body
    %s19 = ssub.s32 %s14, 1
    %s20 = ssub.s32 %s14, 2
    %s27 = sadd.s32 1, %s22
    %p28 = scmp.ge.s32.totalorder %s27, 1
    %s29 = scalar_select %p28, 0, %s27
    %s30 = sadd.s32 1, %s21
    %s31 = scalar_select %p28, %s30, %s21
    %p32 = scmp.ge.s32.totalorder %s31, 2
    %s33 = scalar_select %p32, 0, %s31
    %s34 = ssub.s32 %s21, %s33
    %p35 = scmp.eq.s32.totalorder %s34, 0
    %s37 = sadd.s32 %s36, 1
    %s38 = scalar_select %p35, %s36, %s37
    %p41 = pneg %p35
    %p42 = scmp.eq.s32.totalorder %s14, 1
    %p43 = por %p41, %p42
    %p44 = scmp.ne.s32.totalorder %s36, %s39
    %p45 = scmp.eq.s32.totalorder %s14, 0
    %p46 = por %p44, %p45
    %p47 = scmp.ne.s32.totalorder %s36, %s39
    %p48 = scmp.eq.s32.totalorder %s19, 1
    %p49 = por %p47, %p48
    %p50 = scmp.ne.s32.totalorder %s39, %s40
    %p51 = scmp.eq.s32.totalorder %s19, 0
    %p52 = por %p50, %p51
    %p53 = scmp.ne.s32.totalorder %s39, %s40
    %p54 = scmp.eq.s32.totalorder %s20, 1
    %p55 = por %p53, %p54
    %p57 = scmp.ne.s32.totalorder %s40, %s56
    %p58 = scmp.eq.s32.totalorder %s20, 0
    %p59 = por %p57, %p58
    %s61 = sadd.s32 %s60, 1
    %p64 = scmp.eq.s32.totalorder %s14, 1
    %p65 = scmp.ne.s32.totalorder %s60, %s62
    %p66 = scmp.eq.s32.totalorder %s14, 0
    %p67 = por %p65, %p66
    %p68 = scmp.ne.s32.totalorder %s60, %s62
    %p69 = scmp.eq.s32.totalorder %s19, 1
    %p70 = por %p68, %p69
    %p71 = scmp.ne.s32.totalorder %s62, %s63
    %p72 = scmp.eq.s32.totalorder %s19, 0
    %p73 = por %p71, %p72
    %p74 = scmp.ne.s32.totalorder %s62, %s63
    %p75 = scmp.eq.s32.totalorder %s20, 1
    %p76 = por %p74, %p75
    %p78 = scmp.ne.s32.totalorder %s63, %s77
    %p79 = scmp.eq.s32.totalorder %s20, 0
    %p80 = por %p78, %p79
    %s82 = sadd.s32 %s81, 1
    %p85 = scmp.eq.s32.totalorder %s14, 1
    %p86 = scmp.ne.s32.totalorder %s81, %s83
    %p87 = scmp.eq.s32.totalorder %s14, 0
    %p88 = por %p86, %p87
    %p89 = scmp.ne.s32.totalorder %s81, %s83
    %p90 = scmp.eq.s32.totalorder %s19, 1
    %p91 = por %p89, %p90
    %p92 = scmp.ne.s32.totalorder %s83, %s84
    %p93 = scmp.eq.s32.totalorder %s19, 0
    %p94 = por %p92, %p93
    %p95 = scmp.ne.s32.totalorder %s83, %s84
    %p96 = scmp.eq.s32.totalorder %s20, 1
    %p97 = por %p95, %p96
    %p99 = scmp.ne.s32.totalorder %s84, %s98
    %p100 = scmp.eq.s32.totalorder %s20, 0
    %p101 = por %p99, %p100
    %s103 = sadd.s32 %s102, 1
    %p106 = scmp.eq.s32.totalorder %s14, 1
    %p107 = scmp.ne.s32.totalorder %s102, %s104
    %p108 = scmp.eq.s32.totalorder %s14, 0
    %p109 = por %p107, %p108
    %p110 = scmp.ne.s32.totalorder %s102, %s104
    %p111 = scmp.eq.s32.totalorder %s19, 1
    %p112 = por %p110, %p111
    %p113 = scmp.ne.s32.totalorder %s104, %s105
    %p114 = scmp.eq.s32.totalorder %s19, 0
    %p115 = por %p113, %p114
    %p116 = scmp.ne.s32.totalorder %s104, %s105
    %p117 = scmp.eq.s32.totalorder %s20, 1
    %p118 = por %p116, %p117
    %p120 = scmp.ne.s32.totalorder %s105, %s119
    %p121 = scmp.eq.s32.totalorder %s20, 0
    %p122 = por %p120, %p121
    %s124 = sadd.s32 %s123, 1
    %p127 = scmp.eq.s32.totalorder %s14, 1
    %p128 = scmp.ne.s32.totalorder %s123, %s125
    %p129 = scmp.eq.s32.totalorder %s14, 0
    %p130 = por %p128, %p129
    %p131 = scmp.ne.s32.totalorder %s123, %s125
    %p132 = scmp.eq.s32.totalorder %s19, 1
    %p133 = por %p131, %p132
    %p134 = scmp.ne.s32.totalorder %s125, %s126
    %p135 = scmp.eq.s32.totalorder %s19, 0
    %p136 = por %p134, %p135
    %p137 = scmp.ne.s32.totalorder %s125, %s126
    %p138 = scmp.eq.s32.totalorder %s20, 1
    %p139 = por %p137, %p138
    %p141 = scmp.ne.s32.totalorder %s126, %s140
    %p142 = scmp.eq.s32.totalorder %s20, 0
    %p143 = por %p141, %p142
    %s145 = sadd.s32 %s144, 1
    %p148 = scmp.eq.s32.totalorder %s14, 1
    %p149 = scmp.ne.s32.totalorder %s144, %s146
    %p150 = scmp.eq.s32.totalorder %s14, 0
    %p151 = por %p149, %p150
    %p152 = scmp.ne.s32.totalorder %s144, %s146
    %p153 = scmp.eq.s32.totalorder %s19, 1
    %p154 = por %p152, %p153
    %p155 = scmp.ne.s32.totalorder %s146, %s147
    %p156 = scmp.eq.s32.totalorder %s19, 0
    %p157 = por %p155, %p156
    %p158 = scmp.ne.s32.totalorder %s146, %s147
    %p159 = scmp.eq.s32.totalorder %s20, 1
    %p160 = por %p158, %p159
    %p162 = scmp.ne.s32.totalorder %s147, %s161
    %p163 = scmp.eq.s32.totalorder %s20, 0
    %p164 = por %p162, %p163
    %s166 = sadd.s32 %s165, 1
    %p169 = scmp.eq.s32.totalorder %s14, 1
    %p170 = scmp.ne.s32.totalorder %s165, %s167
    %p171 = scmp.eq.s32.totalorder %s14, 0
    %p172 = por %p170, %p171
    %p173 = scmp.ne.s32.totalorder %s165, %s167
    %p174 = scmp.eq.s32.totalorder %s19, 1
    %p175 = por %p173, %p174
    %p176 = scmp.ne.s32.totalorder %s167, %s168
    %p177 = scmp.eq.s32.totalorder %s19, 0
    %p178 = por %p176, %p177
    %p179 = scmp.ne.s32.totalorder %s167, %s168
    %p180 = scmp.eq.s32.totalorder %s20, 1
    %p181 = por %p179, %p180
    %p183 = scmp.ne.s32.totalorder %s168, %s182
    %p184 = scmp.eq.s32.totalorder %s20, 0
    %p185 = por %p183, %p184
    %s187 = sadd.s32 %s186, 1
    %p190 = scmp.eq.s32.totalorder %s14, 1
    %p191 = scmp.ne.s32.totalorder %s186, %s188
    %p192 = scmp.eq.s32.totalorder %s14, 0
    %p193 = por %p191, %p192
    %p194 = scmp.ne.s32.totalorder %s186, %s188
    %p195 = scmp.eq.s32.totalorder %s19, 1
    %p196 = por %p194, %p195
    %p197 = scmp.ne.s32.totalorder %s188, %s189
    %p198 = scmp.eq.s32.totalorder %s19, 0
    %p199 = por %p197, %p198
    %p200 = scmp.ne.s32.totalorder %s188, %s189
    %p201 = scmp.eq.s32.totalorder %s20, 1
    %p202 = por %p200, %p201
    %p204 = scmp.ne.s32.totalorder %s189, %s203
    %p205 = scmp.eq.s32.totalorder %s20, 0
    %p206 = por %p204, %p205
    %s207 = ssub.s32 %s21, %s33
    %s208 = ssub.s32 %s22, %s29
    %s209 = sor.u32 %s207, %s208
    %p210 = scmp.eq.s32.totalorder %s209, 0
    %s212 = sadd.s32 %s211, 1
    %s213 = scalar_select %p210, %s211, %s212
    %p216 = pneg %p210
    %p217 = scmp.eq.s32.totalorder %s14, 1
    %p218 = por %p216, %p217
    %p219 = scmp.ne.s32.totalorder %s211, %s214
    %p220 = scmp.eq.s32.totalorder %s14, 0
    %p221 = por %p219, %p220
    %p222 = scmp.ne.s32.totalorder %s211, %s214
    %p223 = scmp.eq.s32.totalorder %s19, 1
    %p224 = por %p222, %p223
    %p225 = scmp.ne.s32.totalorder %s214, %s215
    %p226 = scmp.eq.s32.totalorder %s19, 0
    %p227 = por %p225, %p226
    %p228 = scmp.ne.s32.totalorder %s214, %s215
    %p229 = scmp.eq.s32.totalorder %s20, 1
    %p230 = por %p228, %p229
    %p232 = scmp.ne.s32.totalorder %s215, %s231
    %p233 = scmp.eq.s32.totalorder %s20, 0
    %p234 = por %p232, %p233
    %p235 = scmp.le.s32.totalorder 1, %s14
    %p236 = scmp.lt.s32.totalorder %s14, 3
    %p237 = pnand %p235, %p236
    %p238 = pneg %p237
    // Predicated region
    $region9: #{inverted_residual.1} parent=5 // pred_check
      _
    $region10: #{inverted_residual.1} parent=5 // pred_check_branch
      %240 = sbr.rel (%p237) target = $region12
    $region11: #{inverted_residual.1} parent=5 // pred_region
      %s241 = ssub.s32 %s14, 1
      // Predicated region
      $region13: #{inverted_residual.1} parent=11 // pred_check
        %p242 = pneg %p73
      $region14: #{inverted_residual.1} parent=11 // pred_check_branch
        %244 = sbr.rel (%p242) target = $region16
      $region15: #{inverted_residual.1} parent=11 // pred_region
        _
      $region16: #{inverted_residual.1} parent=11 // pred_fallthru
        _
      // Predicated region
      $region17: #{inverted_residual.1} parent=11 // pred_check
        %p245 = pneg %p94
      $region18: #{inverted_residual.1} parent=11 // pred_check_branch
        %247 = sbr.rel (%p245) target = $region20
      $region19: #{inverted_residual.1} parent=11 // pred_region
        _
      $region20: #{inverted_residual.1} parent=11 // pred_fallthru
        _
      // Predicated region
      $region21: #{inverted_residual.1} parent=11 // pred_check
        %p248 = pneg %p115
      $region22: #{inverted_residual.1} parent=11 // pred_check_branch
        %250 = sbr.rel (%p248) target = $region24
      $region23: #{inverted_residual.1} parent=11 // pred_region
        _
      $region24: #{inverted_residual.1} parent=11 // pred_fallthru
        _
      // Predicated region
      $region25: #{inverted_residual.1} parent=11 // pred_check
        %p251 = pneg %p136
      $region26: #{inverted_residual.1} parent=11 // pred_check_branch
        %253 = sbr.rel (%p251) target = $region28
      $region27: #{inverted_residual.1} parent=11 // pred_region
        _
      $region28: #{inverted_residual.1} parent=11 // pred_fallthru
        _
      // Predicated region
      $region29: #{inverted_residual.1} parent=11 // pred_check
        %p254 = pneg %p157
      $region30: #{inverted_residual.1} parent=11 // pred_check_branch
        %256 = sbr.rel (%p254) target = $region32
      $region31: #{inverted_residual.1} parent=11 // pred_region
        _
      $region32: #{inverted_residual.1} parent=11 // pred_fallthru
        _
      // Predicated region
      $region33: #{inverted_residual.1} parent=11 // pred_check
        %p257 = pneg %p178
      $region34: #{inverted_residual.1} parent=11 // pred_check_branch
        %259 = sbr.rel (%p257) target = $region36
      $region35: #{inverted_residual.1} parent=11 // pred_region
        _
      $region36: #{inverted_residual.1} parent=11 // pred_fallthru
        _
      // Predicated region
      $region37: #{inverted_residual.1} parent=11 // pred_check
        %p260 = pneg %p199
      $region38: #{inverted_residual.1} parent=11 // pred_check_branch
        %262 = sbr.rel (%p260) target = $region40
      $region39: #{inverted_residual.1} parent=11 // pred_region
        _
      $region40: #{inverted_residual.1} parent=11 // pred_fallthru
        _
    $region12: #{inverted_residual.1} parent=5 // pred_fallthru
      _
    %p263 = scmp.lt.s32.totalorder %s14, 2
    // Predicated region
    $region41: #{inverted_residual.1} parent=5 // pred_check
      %p264 = pneg %p263
    $region42: #{inverted_residual.1} parent=5 // pred_check_branch
      %266 = sbr.rel (%p264) target = $region44
    $region43: #{inverted_residual.1} parent=5 // pred_region
      // Predicated region
      $region45: #{inverted_residual.1} parent=43 // pred_check
        %p267 = pneg %p46
      $region46: #{inverted_residual.1} parent=43 // pred_check_branch
        %269 = sbr.rel (%p267) target = $region48
      $region47: #{inverted_residual.1} parent=43 // pred_region
        %p270 = scmp.lt.s32.totalorder %s21, 1
        %s271 = scalar_select %p270, %s21, 1
        %s272 = smul.addr %s271, 3
        %s273 = smul.addr %s272, 8
        %s274 = scalar_lea.vmem %s0, %s273
      $region48: #{inverted_residual.1} parent=43 // pred_fallthru
        _
    $region44: #{inverted_residual.1} parent=5 // pred_fallthru
      _
    %p275 = scmp.le.s32.totalorder 1, %s14
    %p276 = scmp.lt.s32.totalorder %s14, 3
    %p277 = pnand %p275, %p276
    %p278 = pneg %p277
    // Predicated region
    $region49: #{inverted_residual.1} parent=5 // pred_check
      _
    $region50: #{inverted_residual.1} parent=5 // pred_check_branch
      %280 = sbr.rel (%p277) target = $region52
    $region51: #{inverted_residual.1} parent=5 // pred_region
      %s281 = ssub.s32 %s14, 1
      %p282 = scmp.lt.s32.totalorder %s23, 1
      %s283 = scalar_select %p282, %s23, 1
      %s284 = smul.addr %s283, 3
      %s285 = smul.addr %s284, 8
      %s286 = scalar_lea.vmem %s0, %s285
      %p287 = pneg %p52
      %p288 = pneg %p49
      %p289 = pneg %p73
      %p290 = pneg %p70
      %p291 = pneg %p94
      %p292 = pneg %p91
      %p293 = pneg %p115
      %p294 = pneg %p112
      %p295 = pneg %p136
      %p296 = pneg %p133
      %p297 = pneg %p157
      %p298 = pneg %p154
      %p299 = pneg %p178
      %p300 = pneg %p175
      %p301 = pneg %p199
      %p302 = pneg %p196
      %p303 = pneg %p227
      %p304 = pneg %p224
      %s305 = smul.u32 3, %s24
      %p306 = scmp.lt.s32.totalorder %s23, 1
      %s307 = scalar_select %p306, %s23, 1
      %p308 = scmp.lt.s32.totalorder %s305, 2
      %s309 = scalar_select %p308, %s305, 2
      %s310 = smul.addr %s307, 3
      %s311 = sadd.s32 %s309, %s310
      %s312 = smul.addr %s311, 8
      %s313 = scalar_lea.vmem %s8, %s312
      %p314 = scmp.lt.s32.totalorder %s23, 1
      %s315 = scalar_select %p314, %s23, 1
      %s316 = smul.addr %s315, 3
      %s317 = smul.addr %s316, 8
      %s318 = scalar_lea.vmem %s0, %s317
      %s319 = smul.u32 3, %s24
      %p320 = scmp.lt.s32.totalorder %s23, 1
      %s321 = scalar_select %p320, %s23, 1
      %p322 = scmp.lt.s32.totalorder %s319, 2
      %s323 = scalar_select %p322, %s319, 2
      %s324 = smul.addr %s321, 3
      %s325 = sadd.s32 %s323, %s324
      %s326 = smul.addr %s325, 8
      %s327 = scalar_lea.vmem %s8, %s326
      %s328 = smul.u32 3, %s24
      %v329 = vld [vmem:[%s318] sm:$0xff]
      %v330 = vld [vmem:[%s318 + $0x8] sm:$0xff]
      %v331 = vld [vmem:[%s318 + $0x10] sm:$0xff]
      %v332 = vld [vmem:[%s1] sm:$0x7]
      %v333 = vld [vmem:[%s2] sm:$0xff]
      %v334 = vld [vmem:[%s2 + $0x8] sm:$0xff]
      %v335 = vld [vmem:[%s2 + $0x10] sm:$0xff]
      %v336 = vld [vmem:[%s3] sm:$0xff]
      %v337 = vld [vmem:[%s3 + $0x8] sm:$0xff]
      %v338 = vld [vmem:[%s3 + $0x10] sm:$0xff]
      %340 = vset.pattern.permute.xlu0 0
      %341 = vperm.xlu0 %340, %v336
      %v342 = vpop.permute.xlu0 %341
      %345 = vset.pattern.permute.xlu0 0
      %346 = vperm.xlu0 %345, %v337
      %v347 = vpop.permute.xlu0 %346
      %350 = vset.pattern.permute.xlu0 0
      %351 = vperm.xlu0 %350, %v338
      %v352 = vpop.permute.xlu0 %351
      %vm354 = vcmask 64512
      %v356 = vsel %vm354, %v333, 0
      %v359 = vsel %vm354, %v334, 0
      %v362 = vsel %vm354, %v335, 0
      %364 = vmatpush.msra.mxu0 0.0
      %365 = vmatpush.msra.mxu0 0.0
      %366 = vmatpush.msra.mxu0 0.0
      %367 = vmatpush.msra.mxu0 0.0
      %368 = vmatpush.msra.mxu0 0.0
      %369 = vmatpush.msra.mxu0 0.0
      %370 = vmatpush.msra.mxu0 0.0
      %371 = vmatpush.msra.mxu0 0.0
      %372 = vmatpush.msra.mxu0 0.0
      %373 = vmatpush.msra.mxu0 0.0
      %374 = vmatpush.msra.mxu0 0.0
      %375 = vmatpush.msra.mxu0 0.0
      %376 = vmatpush.msra.mxu0 0.0
      %377 = vmatpush.msra.mxu0 0.0
      %378 = vmatpush.msra.mxu0 0.0
      %379 = vmatpush.msra.mxu0 %v329
      %380 = vmatmul.f32.gmra.mxu0 %v356
      %v381 = vpop.f32.mrf.mxu0
      %v382 = vadd.f32 %v342, %v381
      %383 = vmatmul.f32.gmra.mxu0 %v359
      %v384 = vpop.f32.mrf.mxu0
      %v385 = vadd.f32 %v347, %v384
      %386 = vmatmul.f32.gmra.mxu0 %v362
      %v387 = vpop.f32.mrf.mxu0
      %v388 = vadd.f32 %v352, %v387
      %389 = vdwg.mxu0
      %390 = vmatpush.msra.mxu0 0.0
      %391 = vmatpush.msra.mxu0 0.0
      %392 = vmatpush.msra.mxu0 0.0
      %393 = vmatpush.msra.mxu0 0.0
      %394 = vmatpush.msra.mxu0 0.0
      %395 = vmatpush.msra.mxu0 0.0
      %396 = vmatpush.msra.mxu0 0.0
      %397 = vmatpush.msra.mxu0 0.0
      %398 = vmatpush.msra.mxu0 0.0
      %399 = vmatpush.msra.mxu0 0.0
      %400 = vmatpush.msra.mxu0 0.0
      %401 = vmatpush.msra.mxu0 0.0
      %402 = vmatpush.msra.mxu0 0.0
      %403 = vmatpush.msra.mxu0 0.0
      %404 = vmatpush.msra.mxu0 0.0
      %405 = vmatpush.msra.mxu0 %v330
      %406 = vmatmul.f32.gmra.mxu0 %v356
      %v407 = vpop.f32.mrf.mxu0
      %v408 = vadd.f32 %v342, %v407
      %409 = vmatmul.f32.gmra.mxu0 %v359
      %v410 = vpop.f32.mrf.mxu0
      %v411 = vadd.f32 %v347, %v410
      %412 = vmatmul.f32.gmra.mxu0 %v362
      %v413 = vpop.f32.mrf.mxu0
      %v414 = vadd.f32 %v352, %v413
      %415 = vdwg.mxu0
      %416 = vmatpush.msra.mxu0 0.0
      %417 = vmatpush.msra.mxu0 0.0
      %418 = vmatpush.msra.mxu0 0.0
      %419 = vmatpush.msra.mxu0 0.0
      %420 = vmatpush.msra.mxu0 0.0
      %421 = vmatpush.msra.mxu0 0.0
      %422 = vmatpush.msra.mxu0 0.0
      %423 = vmatpush.msra.mxu0 0.0
      %424 = vmatpush.msra.mxu0 0.0
      %425 = vmatpush.msra.mxu0 0.0
      %426 = vmatpush.msra.mxu0 0.0
      %427 = vmatpush.msra.mxu0 0.0
      %428 = vmatpush.msra.mxu0 0.0
      %429 = vmatpush.msra.mxu0 0.0
      %430 = vmatpush.msra.mxu0 0.0
      %431 = vmatpush.msra.mxu0 %v331
      %432 = vmatmul.f32.gmra.mxu0 %v356
      %v433 = vpop.f32.mrf.mxu0
      %v434 = vadd.f32 %v342, %v433
      %435 = vmatmul.f32.gmra.mxu0 %v359
      %v436 = vpop.f32.mrf.mxu0
      %v437 = vadd.f32 %v347, %v436
      %438 = vmatmul.f32.gmra.mxu0 %v362
      %v439 = vpop.f32.mrf.mxu0
      %v440 = vadd.f32 %v352, %v439
      %441 = vdwg.mxu0
      %v442 = vmax.f32 %v382, 0.0
      %v443 = vmax.f32 %v408, 0.0
      %v444 = vmax.f32 %v434, 0.0
      %v445 = vmax.f32 %v385, 0.0
      %v446 = vmax.f32 %v411, 0.0
      %v447 = vmax.f32 %v437, 0.0
      %v448 = vmax.f32 %v388, 0.0
      %v449 = vmax.f32 %v414, 0.0
      %v450 = vmax.f32 %v440, 0.0
      %v451 = vmin.f32 %v442, 6.0
      %v452 = vmin.f32 %v443, 6.0
      %v453 = vmin.f32 %v444, 6.0
      %v454 = vmin.f32 %v445, 6.0
      %v455 = vmin.f32 %v446, 6.0
      %v456 = vmin.f32 %v447, 6.0
      %v457 = vmin.f32 %v448, 6.0
      %v458 = vmin.f32 %v449, 6.0
      %v459 = vmin.f32 %v450, 6.0
      %v461 = vperm.slane %v332, 0
      %v462 = vperm.slane %v332, 1
      %v463 = vperm.slane %v332, 2
      %v467 = vmul.f32 %v451, %v461
      %v468 = vmul.f32 %v452, %v462
      %v469 = vmul.f32 %v453, %v463
      %v470 = vmul.f32 %v454, %v461
      %v471 = vmul.f32 %v455, %v462
      %v472 = vmul.f32 %v456, %v463
      %v473 = vmul.f32 %v457, %v461
      %v474 = vmul.f32 %v458, %v462
      %v475 = vmul.f32 %v459, %v463
      %v476 = vld [vmem:[%s4] sm:$0xff]
      %v477 = vld [vmem:[%s4 + $0x8] sm:$0xff]
      %v478 = vld [vmem:[%s4 + $0x10] sm:$0xff]
      %480 = vset.pattern.permute.xlu0 0
      %481 = vperm.xlu0 %480, %v476
      %v482 = vpop.permute.xlu0 %481
      %485 = vset.pattern.permute.xlu0 0
      %486 = vperm.xlu0 %485, %v477
      %v487 = vpop.permute.xlu0 %486
      %490 = vset.pattern.permute.xlu0 0
      %491 = vperm.xlu0 %490, %v478
      %v492 = vpop.permute.xlu0 %491
      %v494 = vmul.f32 %v467, %v482
      %v495 = vmul.f32 %v468, %v482
      %v496 = vmul.f32 %v469, %v482
      %v497 = vmul.f32 %v470, %v487
      %v498 = vmul.f32 %v471, %v487
      %v499 = vmul.f32 %v472, %v487
      %v500 = vmul.f32 %v473, %v492
      %v501 = vmul.f32 %v474, %v492
      %v502 = vmul.f32 %v475, %v492
      %503 = vset.pattern.permute.xlu0 1
      %504 = vperm.xlu0 %503, %v476
      %v505 = vpop.permute.xlu0 %504
      %507 = vset.pattern.permute.xlu0 1
      %508 = vperm.xlu0 %507, %v477
      %v509 = vpop.permute.xlu0 %508
      %511 = vset.pattern.permute.xlu0 1
      %512 = vperm.xlu0 %511, %v478
      %v513 = vpop.permute.xlu0 %512
      %v515 = vmul.f32 %v467, %v505
      %v516 = vmul.f32 %v468, %v505
      %v517 = vmul.f32 %v469, %v505
      %v518 = vmul.f32 %v470, %v509
      %v519 = vmul.f32 %v471, %v509
      %v520 = vmul.f32 %v472, %v509
      %v521 = vmul.f32 %v473, %v513
      %v522 = vmul.f32 %v474, %v513
      %v523 = vmul.f32 %v475, %v513
      %533 = vrot.lane.b32.xlu0 %v515, 127
      %v534 = vpop.permute.xlu0 %533
      %535 = vrot.lane.b32.xlu0 %v516, 127
      %v536 = vpop.permute.xlu0 %535
      %537 = vrot.lane.b32.xlu0 %v517, 127
      %v538 = vpop.permute.xlu0 %537
      %539 = vrot.lane.b32.xlu0 %v518, 127
      %v540 = vpop.permute.xlu0 %539
      %541 = vrot.lane.b32.xlu0 %v519, 127
      %v542 = vpop.permute.xlu0 %541
      %543 = vrot.lane.b32.xlu0 %v520, 127
      %v544 = vpop.permute.xlu0 %543
      %545 = vrot.lane.b32.xlu0 %v521, 127
      %v546 = vpop.permute.xlu0 %545
      %547 = vrot.lane.b32.xlu0 %v522, 127
      %v548 = vpop.permute.xlu0 %547
      %549 = vrot.lane.b32.xlu0 %v523, 127
      %v550 = vpop.permute.xlu0 %549
      %vm551 = vcmask 1039360
      %v552 = vsel %vm551, %v534, %v536
      %v553 = vsel %vm551, %v536, %v538
      %v554 = vsel %vm551, %v540, %v542
      %v555 = vsel %vm551, %v542, %v544
      %v556 = vsel %vm551, %v546, %v548
      %v557 = vsel %vm551, %v548, %v550
      %v567 = vadd.f32 %v494, %v552
      %v568 = vadd.f32 %v495, %v553
      %v569 = vadd.f32 %v496, %v538
      %v570 = vadd.f32 %v497, %v554
      %v571 = vadd.f32 %v498, %v555
      %v572 = vadd.f32 %v499, %v544
      %v573 = vadd.f32 %v500, %v556
      %v574 = vadd.f32 %v501, %v557
      %v575 = vadd.f32 %v502, %v550
      %576 = vset.pattern.permute.xlu0 2
      %577 = vperm.xlu0 %576, %v476
      %v578 = vpop.permute.xlu0 %577
      %580 = vset.pattern.permute.xlu0 2
      %581 = vperm.xlu0 %580, %v477
      %v582 = vpop.permute.xlu0 %581
      %584 = vset.pattern.permute.xlu0 2
      %585 = vperm.xlu0 %584, %v478
      %v586 = vpop.permute.xlu0 %585
      %v588 = vmul.f32 %v467, %v578
      %v589 = vmul.f32 %v468, %v578
      %v590 = vmul.f32 %v469, %v578
      %v591 = vmul.f32 %v470, %v582
      %v592 = vmul.f32 %v471, %v582
      %v593 = vmul.f32 %v472, %v582
      %v594 = vmul.f32 %v473, %v586
      %v595 = vmul.f32 %v474, %v586
      %v596 = vmul.f32 %v475, %v586
      %606 = vrot.lane.b32.xlu0 %v588, 126
      %v607 = vpop.permute.xlu0 %606
      %608 = vrot.lane.b32.xlu0 %v589, 126
      %v609 = vpop.permute.xlu0 %608
      %610 = vrot.lane.b32.xlu0 %v590, 126
      %v611 = vpop.permute.xlu0 %610
      %612 = vrot.lane.b32.xlu0 %v591, 126
      %v613 = vpop.permute.xlu0 %612
      %614 = vrot.lane.b32.xlu0 %v592, 126
      %v615 = vpop.permute.xlu0 %614
      %616 = vrot.lane.b32.xlu0 %v593, 126
      %v617 = vpop.permute.xlu0 %616
      %618 = vrot.lane.b32.xlu0 %v594, 126
      %v619 = vpop.permute.xlu0 %618
      %620 = vrot.lane.b32.xlu0 %v595, 126
      %v621 = vpop.permute.xlu0 %620
      %622 = vrot.lane.b32.xlu0 %v596, 126
      %v623 = vpop.permute.xlu0 %622
      %vm624 = vcmask 1031168
      %v625 = vsel %vm624, %v607, %v609
      %v626 = vsel %vm624, %v609, %v611
      %v627 = vsel %vm624, %v613, %v615
      %v628 = vsel %vm624, %v615, %v617
      %v629 = vsel %vm624, %v619, %v621
      %v630 = vsel %vm624, %v621, %v623
      %v640 = vadd.f32 %v567, %v625
      %v641 = vadd.f32 %v568, %v626
      %v642 = vadd.f32 %v569, %v611
      %v643 = vadd.f32 %v570, %v627
      %v644 = vadd.f32 %v571, %v628
      %v645 = vadd.f32 %v572, %v617
      %v646 = vadd.f32 %v573, %v629
      %v647 = vadd.f32 %v574, %v630
      %v648 = vadd.f32 %v575, %v623
      %649 = vset.pattern.permute.xlu0 3
      %650 = vperm.xlu0 %649, %v476
      %v651 = vpop.permute.xlu0 %650
      %653 = vset.pattern.permute.xlu0 3
      %654 = vperm.xlu0 %653, %v477
      %v655 = vpop.permute.xlu0 %654
      %657 = vset.pattern.permute.xlu0 3
      %658 = vperm.xlu0 %657, %v478
      %v659 = vpop.permute.xlu0 %658
      %v661 = vmul.f32 %v467, %v651
      %v662 = vmul.f32 %v468, %v651
      %v663 = vmul.f32 %v469, %v651
      %v664 = vmul.f32 %v470, %v655
      %v665 = vmul.f32 %v471, %v655
      %v666 = vmul.f32 %v472, %v655
      %v667 = vmul.f32 %v473, %v659
      %v668 = vmul.f32 %v474, %v659
      %v669 = vmul.f32 %v475, %v659
      %679 = vrot.lane.b32.xlu0 %v661, 110
      %v680 = vpop.permute.xlu0 %679
      %681 = vrot.lane.b32.xlu0 %v662, 110
      %v682 = vpop.permute.xlu0 %681
      %683 = vrot.lane.b32.xlu0 %v663, 110
      %v684 = vpop.permute.xlu0 %683
      %685 = vrot.lane.b32.xlu0 %v664, 110
      %v686 = vpop.permute.xlu0 %685
      %687 = vrot.lane.b32.xlu0 %v665, 110
      %v688 = vpop.permute.xlu0 %687
      %689 = vrot.lane.b32.xlu0 %v666, 110
      %v690 = vpop.permute.xlu0 %689
      %691 = vrot.lane.b32.xlu0 %v667, 110
      %v692 = vpop.permute.xlu0 %691
      %693 = vrot.lane.b32.xlu0 %v668, 110
      %v694 = vpop.permute.xlu0 %693
      %695 = vrot.lane.b32.xlu0 %v669, 110
      %v696 = vpop.permute.xlu0 %695
      %vm697 = vcmask 900096
      %v698 = vsel %vm697, %v680, %v682
      %v699 = vsel %vm697, %v682, %v684
      %v700 = vsel %vm697, %v686, %v688
      %v701 = vsel %vm697, %v688, %v690
      %v702 = vsel %vm697, %v692, %v694
      %v703 = vsel %vm697, %v694, %v696
      %v713 = vadd.f32 %v640, %v698
      %v714 = vadd.f32 %v641, %v699
      %v715 = vadd.f32 %v642, %v684
      %v716 = vadd.f32 %v643, %v700
      %v717 = vadd.f32 %v644, %v701
      %v718 = vadd.f32 %v645, %v690
      %v719 = vadd.f32 %v646, %v702
      %v720 = vadd.f32 %v647, %v703
      %v721 = vadd.f32 %v648, %v696
      %722 = vset.pattern.permute.xlu0 4
      %723 = vperm.xlu0 %722, %v476
      %v724 = vpop.permute.xlu0 %723
      %726 = vset.pattern.permute.xlu0 4
      %727 = vperm.xlu0 %726, %v477
      %v728 = vpop.permute.xlu0 %727
      %730 = vset.pattern.permute.xlu0 4
      %731 = vperm.xlu0 %730, %v478
      %v732 = vpop.permute.xlu0 %731
      %v734 = vmul.f32 %v467, %v724
      %v735 = vmul.f32 %v468, %v724
      %v736 = vmul.f32 %v469, %v724
      %v737 = vmul.f32 %v470, %v728
      %v738 = vmul.f32 %v471, %v728
      %v739 = vmul.f32 %v472, %v728
      %v740 = vmul.f32 %v473, %v732
      %v741 = vmul.f32 %v474, %v732
      %v742 = vmul.f32 %v475, %v732
      %752 = vrot.lane.b32.xlu0 %v734, 109
      %v753 = vpop.permute.xlu0 %752
      %754 = vrot.lane.b32.xlu0 %v735, 109
      %v755 = vpop.permute.xlu0 %754
      %756 = vrot.lane.b32.xlu0 %v736, 109
      %v757 = vpop.permute.xlu0 %756
      %758 = vrot.lane.b32.xlu0 %v737, 109
      %v759 = vpop.permute.xlu0 %758
      %760 = vrot.lane.b32.xlu0 %v738, 109
      %v761 = vpop.permute.xlu0 %760
      %762 = vrot.lane.b32.xlu0 %v739, 109
      %v763 = vpop.permute.xlu0 %762
      %764 = vrot.lane.b32.xlu0 %v740, 109
      %v765 = vpop.permute.xlu0 %764
      %766 = vrot.lane.b32.xlu0 %v741, 109
      %v767 = vpop.permute.xlu0 %766
      %768 = vrot.lane.b32.xlu0 %v742, 109
      %v769 = vpop.permute.xlu0 %768
      %vm770 = vcmask 891904
      %v771 = vsel %vm770, %v753, %v755
      %v772 = vsel %vm770, %v755, %v757
      %v773 = vsel %vm770, %v759, %v761
      %v774 = vsel %vm770, %v761, %v763
      %v775 = vsel %vm770, %v765, %v767
      %v776 = vsel %vm770, %v767, %v769
      %v786 = vadd.f32 %v713, %v771
      %v787 = vadd.f32 %v714, %v772
      %v788 = vadd.f32 %v715, %v757
      %v789 = vadd.f32 %v716, %v773
      %v790 = vadd.f32 %v717, %v774
      %v791 = vadd.f32 %v718, %v763
      %v792 = vadd.f32 %v719, %v775
      %v793 = vadd.f32 %v720, %v776
      %v794 = vadd.f32 %v721, %v769
      %795 = vset.pattern.permute.xlu0 5
      %796 = vperm.xlu0 %795, %v476
      %v797 = vpop.permute.xlu0 %796
      %799 = vset.pattern.permute.xlu0 5
      %800 = vperm.xlu0 %799, %v477
      %v801 = vpop.permute.xlu0 %800
      %803 = vset.pattern.permute.xlu0 5
      %804 = vperm.xlu0 %803, %v478
      %v805 = vpop.permute.xlu0 %804
      %v807 = vmul.f32 %v467, %v797
      %v808 = vmul.f32 %v468, %v797
      %v809 = vmul.f32 %v469, %v797
      %v810 = vmul.f32 %v470, %v801
      %v811 = vmul.f32 %v471, %v801
      %v812 = vmul.f32 %v472, %v801
      %v813 = vmul.f32 %v473, %v805
      %v814 = vmul.f32 %v474, %v805
      %v815 = vmul.f32 %v475, %v805
      %825 = vrot.lane.b32.xlu0 %v807, 108
      %v826 = vpop.permute.xlu0 %825
      %827 = vrot.lane.b32.xlu0 %v808, 108
      %v828 = vpop.permute.xlu0 %827
      %829 = vrot.lane.b32.xlu0 %v809, 108
      %v830 = vpop.permute.xlu0 %829
      %831 = vrot.lane.b32.xlu0 %v810, 108
      %v832 = vpop.permute.xlu0 %831
      %833 = vrot.lane.b32.xlu0 %v811, 108
      %v834 = vpop.permute.xlu0 %833
      %835 = vrot.lane.b32.xlu0 %v812, 108
      %v836 = vpop.permute.xlu0 %835
      %837 = vrot.lane.b32.xlu0 %v813, 108
      %v838 = vpop.permute.xlu0 %837
      %839 = vrot.lane.b32.xlu0 %v814, 108
      %v840 = vpop.permute.xlu0 %839
      %841 = vrot.lane.b32.xlu0 %v815, 108
      %v842 = vpop.permute.xlu0 %841
      %vm843 = vcmask 883712
      %v844 = vsel %vm843, %v826, %v828
      %v845 = vsel %vm843, %v828, %v830
      %v846 = vsel %vm843, %v832, %v834
      %v847 = vsel %vm843, %v834, %v836
      %v848 = vsel %vm843, %v838, %v840
      %v849 = vsel %vm843, %v840, %v842
      %v859 = vadd.f32 %v786, %v844
      %v860 = vadd.f32 %v787, %v845
      %v861 = vadd.f32 %v788, %v830
      %v862 = vadd.f32 %v789, %v846
      %v863 = vadd.f32 %v790, %v847
      %v864 = vadd.f32 %v791, %v836
      %v865 = vadd.f32 %v792, %v848
      %v866 = vadd.f32 %v793, %v849
      %v867 = vadd.f32 %v794, %v842
      %868 = vset.pattern.permute.xlu0 6
      %869 = vperm.xlu0 %868, %v476
      %v870 = vpop.permute.xlu0 %869
      %872 = vset.pattern.permute.xlu0 6
      %873 = vperm.xlu0 %872, %v477
      %v874 = vpop.permute.xlu0 %873
      %876 = vset.pattern.permute.xlu0 6
      %877 = vperm.xlu0 %876, %v478
      %v878 = vpop.permute.xlu0 %877
      %v880 = vmul.f32 %v467, %v870
      %v881 = vmul.f32 %v468, %v870
      %v882 = vmul.f32 %v469, %v870
      %v883 = vmul.f32 %v470, %v874
      %v884 = vmul.f32 %v471, %v874
      %v885 = vmul.f32 %v472, %v874
      %v886 = vmul.f32 %v473, %v878
      %v887 = vmul.f32 %v474, %v878
      %v888 = vmul.f32 %v475, %v878
      %898 = vrot.lane.b32.xlu0 %v880, 92
      %v899 = vpop.permute.xlu0 %898
      %900 = vrot.lane.b32.xlu0 %v881, 92
      %v901 = vpop.permute.xlu0 %900
      %902 = vrot.lane.b32.xlu0 %v882, 92
      %v903 = vpop.permute.xlu0 %902
      %904 = vrot.lane.b32.xlu0 %v883, 92
      %v905 = vpop.permute.xlu0 %904
      %906 = vrot.lane.b32.xlu0 %v884, 92
      %v907 = vpop.permute.xlu0 %906
      %908 = vrot.lane.b32.xlu0 %v885, 92
      %v909 = vpop.permute.xlu0 %908
      %910 = vrot.lane.b32.xlu0 %v886, 92
      %v911 = vpop.permute.xlu0 %910
      %912 = vrot.lane.b32.xlu0 %v887, 92
      %v913 = vpop.permute.xlu0 %912
      %914 = vrot.lane.b32.xlu0 %v888, 92
      %v915 = vpop.permute.xlu0 %914
      %vm916 = vcmask 752640
      %v917 = vsel %vm916, %v899, %v901
      %v918 = vsel %vm916, %v901, %v903
      %v919 = vsel %vm916, %v905, %v907
      %v920 = vsel %vm916, %v907, %v909
      %v921 = vsel %vm916, %v911, %v913
      %v922 = vsel %vm916, %v913, %v915
      %v932 = vadd.f32 %v859, %v917
      %v933 = vadd.f32 %v860, %v918
      %v934 = vadd.f32 %v861, %v903
      %v935 = vadd.f32 %v862, %v919
      %v936 = vadd.f32 %v863, %v920
      %v937 = vadd.f32 %v864, %v909
      %v938 = vadd.f32 %v865, %v921
      %v939 = vadd.f32 %v866, %v922
      %v940 = vadd.f32 %v867, %v915
      %941 = vset.pattern.permute.xlu0 7
      %942 = vperm.xlu0 %941, %v476
      %v943 = vpop.permute.xlu0 %942
      %945 = vset.pattern.permute.xlu0 7
      %946 = vperm.xlu0 %945, %v477
      %v947 = vpop.permute.xlu0 %946
      %949 = vset.pattern.permute.xlu0 7
      %950 = vperm.xlu0 %949, %v478
      %v951 = vpop.permute.xlu0 %950
      %v953 = vmul.f32 %v467, %v943
      %v954 = vmul.f32 %v468, %v943
      %v955 = vmul.f32 %v469, %v943
      %v956 = vmul.f32 %v470, %v947
      %v957 = vmul.f32 %v471, %v947
      %v958 = vmul.f32 %v472, %v947
      %v959 = vmul.f32 %v473, %v951
      %v960 = vmul.f32 %v474, %v951
      %v961 = vmul.f32 %v475, %v951
      %971 = vrot.lane.b32.xlu0 %v953, 91
      %v972 = vpop.permute.xlu0 %971
      %973 = vrot.lane.b32.xlu0 %v954, 91
      %v974 = vpop.permute.xlu0 %973
      %975 = vrot.lane.b32.xlu0 %v955, 91
      %v976 = vpop.permute.xlu0 %975
      %977 = vrot.lane.b32.xlu0 %v956, 91
      %v978 = vpop.permute.xlu0 %977
      %979 = vrot.lane.b32.xlu0 %v957, 91
      %v980 = vpop.permute.xlu0 %979
      %981 = vrot.lane.b32.xlu0 %v958, 91
      %v982 = vpop.permute.xlu0 %981
      %983 = vrot.lane.b32.xlu0 %v959, 91
      %v984 = vpop.permute.xlu0 %983
      %985 = vrot.lane.b32.xlu0 %v960, 91
      %v986 = vpop.permute.xlu0 %985
      %987 = vrot.lane.b32.xlu0 %v961, 91
      %v988 = vpop.permute.xlu0 %987
      %vm989 = vcmask 744448
      %v990 = vsel %vm989, %v972, %v974
      %v991 = vsel %vm989, %v974, %v976
      %v992 = vsel %vm989, %v978, %v980
      %v993 = vsel %vm989, %v980, %v982
      %v994 = vsel %vm989, %v984, %v986
      %v995 = vsel %vm989, %v986, %v988
      %v1005 = vadd.f32 %v932, %v990
      %v1006 = vadd.f32 %v933, %v991
      %v1007 = vadd.f32 %v934, %v976
      %v1008 = vadd.f32 %v935, %v992
      %v1009 = vadd.f32 %v936, %v993
      %v1010 = vadd.f32 %v937, %v982
      %v1011 = vadd.f32 %v938, %v994
      %v1012 = vadd.f32 %v939, %v995
      %v1013 = vadd.f32 %v940, %v988
      %1014 = vset.pattern.permute.xlu0 8
      %1015 = vperm.xlu0 %1014, %v476
      %v1016 = vpop.permute.xlu0 %1015
      %1018 = vset.pattern.permute.xlu0 8
      %1019 = vperm.xlu0 %1018, %v477
      %v1020 = vpop.permute.xlu0 %1019
      %1022 = vset.pattern.permute.xlu0 8
      %1023 = vperm.xlu0 %1022, %v478
      %v1024 = vpop.permute.xlu0 %1023
      %v1026 = vmul.f32 %v467, %v1016
      %v1027 = vmul.f32 %v468, %v1016
      %v1028 = vmul.f32 %v469, %v1016
      %v1029 = vmul.f32 %v470, %v1020
      %v1030 = vmul.f32 %v471, %v1020
      %v1031 = vmul.f32 %v472, %v1020
      %v1032 = vmul.f32 %v473, %v1024
      %v1033 = vmul.f32 %v474, %v1024
      %v1034 = vmul.f32 %v475, %v1024
      %1044 = vrot.lane.b32.xlu0 %v1026, 90
      %v1045 = vpop.permute.xlu0 %1044
      %1046 = vrot.lane.b32.xlu0 %v1027, 90
      %v1047 = vpop.permute.xlu0 %1046
      %1048 = vrot.lane.b32.xlu0 %v1028, 90
      %v1049 = vpop.permute.xlu0 %1048
      %1050 = vrot.lane.b32.xlu0 %v1029, 90
      %v1051 = vpop.permute.xlu0 %1050
      %1052 = vrot.lane.b32.xlu0 %v1030, 90
      %v1053 = vpop.permute.xlu0 %1052
      %1054 = vrot.lane.b32.xlu0 %v1031, 90
      %v1055 = vpop.permute.xlu0 %1054
      %1056 = vrot.lane.b32.xlu0 %v1032, 90
      %v1057 = vpop.permute.xlu0 %1056
      %1058 = vrot.lane.b32.xlu0 %v1033, 90
      %v1059 = vpop.permute.xlu0 %1058
      %1060 = vrot.lane.b32.xlu0 %v1034, 90
      %v1061 = vpop.permute.xlu0 %1060
      %vm1062 = vcmask 736256
      %v1063 = vsel %vm1062, %v1045, %v1047
      %v1064 = vsel %vm1062, %v1047, %v1049
      %v1065 = vsel %vm1062, %v1051, %v1053
      %v1066 = vsel %vm1062, %v1053, %v1055
      %v1067 = vsel %vm1062, %v1057, %v1059
      %v1068 = vsel %vm1062, %v1059, %v1061
      %v1078 = vadd.f32 %v1005, %v1063
      %v1079 = vadd.f32 %v1006, %v1064
      %v1080 = vadd.f32 %v1007, %v1049
      %v1081 = vadd.f32 %v1008, %v1065
      %v1082 = vadd.f32 %v1009, %v1066
      %v1083 = vadd.f32 %v1010, %v1055
      %v1084 = vadd.f32 %v1011, %v1067
      %v1085 = vadd.f32 %v1012, %v1068
      %v1086 = vadd.f32 %v1013, %v1061
      %v1087 = vld [vmem:[%s5] sm:$0xff]
      %v1088 = vld [vmem:[%s5 + $0x8] sm:$0xff]
      %v1089 = vld [vmem:[%s5 + $0x10] sm:$0xff]
      %1091 = vset.pattern.permute.xlu0 0
      %1092 = vperm.xlu0 %1091, %v1087
      %v1093 = vpop.permute.xlu0 %1092
      %1096 = vset.pattern.permute.xlu0 0
      %1097 = vperm.xlu0 %1096, %v1088
      %v1098 = vpop.permute.xlu0 %1097
      %1101 = vset.pattern.permute.xlu0 0
      %1102 = vperm.xlu0 %1101, %v1089
      %v1103 = vpop.permute.xlu0 %1102
      %v1105 = vadd.f32 %v1078, %v1093
      %v1106 = vadd.f32 %v1079, %v1093
      %v1107 = vadd.f32 %v1080, %v1093
      %v1108 = vadd.f32 %v1081, %v1098
      %v1109 = vadd.f32 %v1082, %v1098
      %v1110 = vadd.f32 %v1083, %v1098
      %v1111 = vadd.f32 %v1084, %v1103
      %v1112 = vadd.f32 %v1085, %v1103
      %v1113 = vadd.f32 %v1086, %v1103
      %v1114 = vmax.f32 %v1105, 0.0
      %v1115 = vmax.f32 %v1106, 0.0
      %v1116 = vmax.f32 %v1107, 0.0
      %v1117 = vmax.f32 %v1108, 0.0
      %v1118 = vmax.f32 %v1109, 0.0
      %v1119 = vmax.f32 %v1110, 0.0
      %v1120 = vmax.f32 %v1111, 0.0
      %v1121 = vmax.f32 %v1112, 0.0
      %v1122 = vmax.f32 %v1113, 0.0
      %v1123 = vmin.f32 %v1114, 6.0
      %v1124 = vmin.f32 %v1115, 6.0
      %v1125 = vmin.f32 %v1116, 6.0
      %v1126 = vmin.f32 %v1117, 6.0
      %v1127 = vmin.f32 %v1118, 6.0
      %v1128 = vmin.f32 %v1119, 6.0
      %v1129 = vmin.f32 %v1120, 6.0
      %v1130 = vmin.f32 %v1121, 6.0
      %v1131 = vmin.f32 %v1122, 6.0
      %v1132 = vld [vmem:[%s6] sm:$0xff]
      %v1133 = vld [vmem:[%s7] sm:$0xff]
      %1135 = vset.pattern.permute.xlu0 0
      %1136 = vperm.xlu0 %1135, %v1133
      %v1137 = vpop.permute.xlu0 %1136
      %vm1139 = vcmask 195584
      %v1141 = vsel %vm1139, %v1132, 0
      %1143 = vmatpush.msra.mxu0 0.0
      %1144 = vmatpush.msra.mxu0 0.0
      %1145 = vmatpush.msra.mxu0 0.0
      %1146 = vmatpush.msra.mxu0 0.0
      %1147 = vmatpush.msra.mxu0 0.0
      %1148 = vmatpush.msra.mxu0 0.0
      %1149 = vmatpush.msra.mxu0 0.0
      %1150 = vmatpush.msra.mxu0 0.0
      %1151 = vmatpush.msra.mxu0 0.0
      %1152 = vmatpush.msra.mxu0 0.0
      %1153 = vmatpush.msra.mxu0 0.0
      %1154 = vmatpush.msra.mxu0 0.0
      %1155 = vmatpush.msra.mxu0 0.0
      %1156 = vmatpush.msra.mxu0 %v1129
      %1157 = vmatpush.msra.mxu0 %v1126
      %1158 = vmatpush.msra.mxu0 %v1123
      %1159 = vmatmul.f32.gmra.mxu0 %v1141
      %v1160 = vpop.f32.mrf.mxu0
      %v1161 = vadd.f32 %v1137, %v1160
      %1162 = vdwg.mxu0
      %1163 = vmatpush.msra.mxu0 0.0
      %1164 = vmatpush.msra.mxu0 0.0
      %1165 = vmatpush.msra.mxu0 0.0
      %1166 = vmatpush.msra.mxu0 0.0
      %1167 = vmatpush.msra.mxu0 0.0
      %1168 = vmatpush.msra.mxu0 0.0
      %1169 = vmatpush.msra.mxu0 0.0
      %1170 = vmatpush.msra.mxu0 0.0
      %1171 = vmatpush.msra.mxu0 0.0
      %1172 = vmatpush.msra.mxu0 0.0
      %1173 = vmatpush.msra.mxu0 0.0
      %1174 = vmatpush.msra.mxu0 0.0
      %1175 = vmatpush.msra.mxu0 0.0
      %1176 = vmatpush.msra.mxu0 %v1130
      %1177 = vmatpush.msra.mxu0 %v1127
      %1178 = vmatpush.msra.mxu0 %v1124
      %1179 = vmatmul.f32.gmra.mxu0 %v1141
      %v1180 = vpop.f32.mrf.mxu0
      %v1181 = vadd.f32 %v1137, %v1180
      %1182 = vdwg.mxu0
      %1183 = vmatpush.msra.mxu0 0.0
      %1184 = vmatpush.msra.mxu0 0.0
      %1185 = vmatpush.msra.mxu0 0.0
      %1186 = vmatpush.msra.mxu0 0.0
      %1187 = vmatpush.msra.mxu0 0.0
      %1188 = vmatpush.msra.mxu0 0.0
      %1189 = vmatpush.msra.mxu0 0.0
      %1190 = vmatpush.msra.mxu0 0.0
      %1191 = vmatpush.msra.mxu0 0.0
      %1192 = vmatpush.msra.mxu0 0.0
      %1193 = vmatpush.msra.mxu0 0.0
      %1194 = vmatpush.msra.mxu0 0.0
      %1195 = vmatpush.msra.mxu0 0.0
      %1196 = vmatpush.msra.mxu0 %v1131
      %1197 = vmatpush.msra.mxu0 %v1128
      %1198 = vmatpush.msra.mxu0 %v1125
      %1199 = vmatmul.f32.gmra.mxu0 %v1141
      %v1200 = vpop.f32.mrf.mxu0
      %v1201 = vadd.f32 %v1137, %v1200
      %1202 = vdwg.mxu0
      %1206 = vrot.lane.b32.xlu0 %v329, 109
      %v1207 = vpop.permute.xlu0 %1206
      %1208 = vrot.lane.b32.xlu0 %v330, 109
      %v1209 = vpop.permute.xlu0 %1208
      %1210 = vrot.lane.b32.xlu0 %v331, 109
      %v1211 = vpop.permute.xlu0 %1210
      %v1212 = vsel %vm770, %v1207, %v1209
      %v1213 = vsel %vm770, %v1209, %v1211
      %v1217 = vadd.f32 %v1161, %v1212
      %v1218 = vadd.f32 %v1181, %v1213
      %v1219 = vadd.f32 %v1201, %v1211
      %1220 = vst [vmem:[%s327] sm:$0xff] %v1217
      %1221 = vst [vmem:[%s327 + $0x8] sm:$0xff] %v1218
      %vm1222 = vcmask 261120
      %1223 = vst.msk [vmem:[%s327 + $0x10] sm:$0xff] %vm1222, %v1219
      %s1224 = smul.u32 3, %s24
      %p1225 = scmp.lt.s32.totalorder %s23, 1
      %s1226 = scalar_select %p1225, %s23, 1
      %p1227 = scmp.lt.s32.totalorder %s1224, 2
      %s1228 = scalar_select %p1227, %s1224, 2
      %s1229 = smul.addr %s1226, 3
      %s1230 = sadd.s32 %s1228, %s1229
      %s1231 = smul.addr %s1230, 8
      %s1232 = scalar_lea.vmem %s8, %s1231
      // Predicated region
      $region53: #{inverted_residual.1} parent=51 // pred_check
        %p1233 = pneg %p224
      $region54: #{inverted_residual.1} parent=51 // pred_check_branch
        %1235 = sbr.rel (%p1233) target = $region56
      $region55: #{inverted_residual.1} parent=51 // pred_region
        %s1236 = smul.u32 3, %s24
      $region56: #{inverted_residual.1} parent=51 // pred_fallthru
        _
    $region52: #{inverted_residual.1} parent=5 // pred_fallthru
      _
    %p1237 = scmp.le.s32.totalorder 2, %s14
    // Predicated region
    $region57: #{inverted_residual.1} parent=5 // pred_check
      %p1238 = pneg %p1237
    $region58: #{inverted_residual.1} parent=5 // pred_check_branch
      %1240 = sbr.rel (%p1238) target = $region60
    $region59: #{inverted_residual.1} parent=5 // pred_region
      %s1241 = ssub.s32 %s14, 2
      // Predicated region
      $region61: #{inverted_residual.1} parent=59 // pred_check
        %p1242 = pneg %p230
      $region62: #{inverted_residual.1} parent=59 // pred_check_branch
        %1244 = sbr.rel (%p1242) target = $region64
      $region63: #{inverted_residual.1} parent=59 // pred_region
        %s1245 = smul.u32 3, %s26
        %p1246 = scmp.lt.s32.totalorder %s25, 1
        %s1247 = scalar_select %p1246, %s25, 1
        %p1248 = scmp.lt.s32.totalorder %s1245, 2
        %s1249 = scalar_select %p1248, %s1245, 2
        %s1250 = smul.addr %s1247, 3
        %s1251 = sadd.s32 %s1249, %s1250
        %s1252 = smul.addr %s1251, 8
        %s1253 = scalar_lea.vmem %s8, %s1252
      $region64: #{inverted_residual.1} parent=59 // pred_fallthru
        _
    $region60: #{inverted_residual.1} parent=5 // pred_fallthru
      _
  $region6: #{inverted_residual.1} parent=0 // loop_footer
    %s18 = sadd.s32 1, %s14
  $region7: #{inverted_residual.1} parent=0 // loop_footer_branch
    %13 = sbr.rel target = $region3
  $region8: #{inverted_residual.1} parent=0 // loop_exit
    _

</llo_original>
